<compile_context>
chip_gen: v5e
topology: v5e:2x2
jax: 0.10.0
libtpu: 0.0.40
codegen_flags: <defaults>
</compile_context>

<pallas_src>
import functools
import math

import jax
import jax.numpy as jnp
from jax.experimental import pallas as pl
from jax.experimental.pallas import tpu as pltpu


def conv_layer_kernel(x_ref, w1_ref, b1_ref, w2_ref, b2_ref, w3_ref, b3_ref,
                      o_ref, *, L1):
    """One grid step processes NB whole samples flattened into the M dimension.

    x_ref  : (TM, 3*Cin)  conv1 im2col rows (TM = NB*L1, built in the wrapper)
    w1_ref : (3*Cin, C1)  conv1 weights, taps fused along K
    w2_ref : (3*C1, C2)   conv2 weights, taps fused along K
    w3_ref : (3*C2, C3)   conv3 weights, taps fused along K
    bK_ref : (1, CK)      biases
    o_ref  : (TM, C3)     output rows (channels-last)
    """
    TM = x_ref.shape[0]

    # Position within the sample.  Every block starts at a sample boundary
    # (TM = NB*L1), so an iota modulo L1 is exact -- no pos input stream needed.
    pos = jax.lax.broadcasted_iota(jnp.int32, (TM, 1), 0) % L1
    first = pos == 0                # first row of each sample
    last = pos == (L1 - 1)          # last row of each sample

    # ---- conv1: kernel=3, stride=2, pad=0 -> one fused-tap matmul ----
    h1 = jnp.maximum(
        jnp.dot(x_ref[...], w1_ref[...], preferred_element_type=jnp.float32)
        + b1_ref[...], 0.0)

    # ---- conv2: kernel=3, stride=1, pad=1 ----
    # Neighbour rows come from an XLU sublane roll; the circular wrap rows are
    # exactly the rows the first/last masks force to zero, so no scratch / no
    # boundary-row zeroing is needed.  Taps are fused along K into one matmul.
    prev1 = jnp.where(first, 0.0, pltpu.roll(h1, shift=1, axis=0))        # h1[t-1]
    next1 = jnp.where(last, 0.0, pltpu.roll(h1, shift=TM - 1, axis=0))    # h1[t+1]
    x2 = jnp.concatenate([prev1, h1, next1], axis=-1)                     # (TM, 3*C1)
    h2 = jnp.maximum(
        jnp.dot(x2, w2_ref[...], preferred_element_type=jnp.float32)
        + b2_ref[...], 0.0)

    # ---- conv3: kernel=3, stride=1, pad=1 ----
    prev2 = jnp.where(first, 0.0, pltpu.roll(h2, shift=1, axis=0))
    next2 = jnp.where(last, 0.0, pltpu.roll(h2, shift=TM - 1, axis=0))
    x3 = jnp.concatenate([prev2, h2, next2], axis=-1)                     # (TM, 3*C2)
    o_ref[...] = jnp.maximum(
        jnp.dot(x3, w3_ref[...], preferred_element_type=jnp.float32)
        + b3_ref[...], 0.0)


def _choose_tiling(B, L1, target_rows=1024, sublane=8, min_steps=2):
    """Pick (NB, steps) so that TM = NB*L1 is a multiple of 8, per-step rows are
    close to target_rows, and the grid has >= min_steps steps (for the 2 TCs on
    v7x) whenever the batch is large enough for the split not to be mostly padding."""
    unit = sublane // math.gcd(L1, sublane)          # smallest NB with (NB*L1) % 8 == 0
    nb_cap = max(unit, (target_rows // (unit * L1)) * unit)
    steps = max(1, -(-B // nb_cap))                  # ceil(B / nb_cap)
    if steps < min_steps and B >= min_steps * unit:
        steps = min_steps
    nb = -(-B // steps)                              # ceil(B / steps)
    nb = -(-nb // unit) * unit                       # round up to alignment unit
    return nb, steps


def conv_layer_forward(x_ncl, params):
    """x_ncl: (B, Cin, L) float32 (PyTorch NCL). Returns (B, hidden, L1)."""
    (w1, b1), (w2, b2), (w3, b3) = params
    B, cin, L = x_ncl.shape
    L1 = (L - 3) // 2 + 1
    c1, c2, c3 = w1.shape[2], w2.shape[2], w3.shape[2]

    nb, steps = _choose_tiling(B, L1)
    B_pad = nb * steps
    TM = nb * L1

    # Zero-pad the batch so every grid step gets exactly NB whole samples (padded
    # samples are computed and discarded; keeps all BlockSpecs 8-aligned).
    if B_pad != B:
        x_ncl = jnp.pad(x_ncl, ((0, B_pad - B), (0, 0), (0, 0)))

    # ---- XLA-side layout prep (fused under jit): channels-last + conv1 im2col ----
    x_blc = jnp.transpose(x_ncl, (0, 2, 1))                      # (B_pad, L, Cin)
    x_tap0 = x_blc[:, 0:2 * L1:2, :]                             # x[2t]
    x_tap1 = x_blc[:, 1:2 * L1:2, :]                             # x[2t+1]
    x_tap2 = x_blc[:, 2:2 * L1 + 1:2, :]                         # x[2t+2]
    xcat = jnp.concatenate([x_tap0, x_tap1, x_tap2], axis=-1)    # (B_pad, L1, 3*Cin)
    xcat = xcat.reshape(B_pad * L1, 3 * cin)

    # Taps fused along K for all three convs.
    w1f = w1.reshape(3 * cin, c1)
    w2f = w2.reshape(3 * c1, c2)
    w3f = w3.reshape(3 * c2, c3)

    out2d = pl.pallas_call(
        functools.partial(conv_layer_kernel, L1=L1),
        out_shape=jax.ShapeDtypeStruct((B_pad * L1, c3), jnp.float32),
        grid=(steps,),
        in_specs=[
            pl.BlockSpec((TM, 3 * cin), lambda i: (i, 0)),
            pl.BlockSpec(w1f.shape, lambda i: (0, 0)),
            pl.BlockSpec(b1.shape, lambda i: (0, 0)),
            pl.BlockSpec(w2f.shape, lambda i: (0, 0)),
            pl.BlockSpec(b2.shape, lambda i: (0, 0)),
            pl.BlockSpec(w3f.shape, lambda i: (0, 0)),
            pl.BlockSpec(b3.shape, lambda i: (0, 0)),
        ],
        out_specs=pl.BlockSpec((TM, c3), lambda i: (i, 0)),
        compiler_params=pltpu.CompilerParams(dimension_semantics=("parallel",)),
    )(xcat, w1f, b1, w2f, b2, w3f, b3)

    # Back to PyTorch NCL layout; drop padded samples.
    out_blc = out2d.reshape(B_pad, L1, c3)[:B]
    return jnp.transpose(out_blc, (0, 2, 1))                     # (B, C3, L1)


# ---------------- parameter init (xavier_uniform, ReLU gain, bias=0) ----------------
def init_conv_params(key, cin, cout, ksize=3, gain=jnp.sqrt(2.0)):
    fan_in, fan_out = cin * ksize, cout * ksize
    bound = gain * jnp.sqrt(6.0 / (fan_in + fan_out))
    w = jax.random.uniform(key, (ksize, cin, cout), jnp.float32, -bound, bound)
    b = jnp.zeros((1, cout), jnp.float32)                        # constant_(bias, 0)
    return w, b


# ------------- plain-JAX reference (mirrors PyTorch Conv1d semantics) -------------
def conv1d_ref(x_blc, w, b, stride, pad):
    k = w.shape[0]
    if pad:
        x_blc = jnp.pad(x_blc, ((0, 0), (pad, pad), (0, 0)))
    lp = x_blc.shape[1]
    lout = (lp - k) // stride + 1
    acc = jnp.zeros((x_blc.shape[0], lout, w.shape[2]), jnp.float32)
    for t in range(k):
        xs = x_blc[:, t:t + stride * (lout - 1) + 1:stride, :]
        acc = acc + jnp.einsum('blc,cd->bld', xs, w[t])
    return acc + b[None]


def reference_forward(x_ncl, params):
    (w1, b1), (w2, b2), (w3, b3) = params
    h = jnp.transpose(x_ncl, (0, 2, 1))
    h = jnp.maximum(conv1d_ref(h, w1, b1, stride=2, pad=0), 0.0)
    h = jnp.maximum(conv1d_ref(h, w2, b2, stride=1, pad=1), 0.0)
    h = jnp.maximum(conv1d_ref(h, w3, b3, stride=1, pad=1), 0.0)
    return jnp.transpose(h, (0, 2, 1))


if __name__ == "__main__":
    # CONVLayer(input_dim=4, hidden_size=32, use_orthogonal=0, activation_id=1)
    B, Cin, L, hidden = 2, 4, 16, 32
    key = jax.random.PRNGKey(0)
    kx, k1, k2, k3 = jax.random.split(key, 4)

    x = jax.random.normal(kx, (B, Cin, L), jnp.float32)          # NCL, like PyTorch
    params = (
        init_conv_params(k1, Cin, hidden // 4),
        init_conv_params(k2, hidden // 4, hidden // 2),
        init_conv_params(k3, hidden // 2, hidden),
    )

    fwd = jax.jit(conv_layer_forward)
    out = jax.block_until_ready(fwd(x, params))
    ref = jax.block_until_ready(reference_forward(x, params))

    assert out.shape == (B, hidden, (L - 3) // 2 + 1), out.shape
    assert jnp.allclose(out, ref, atol=1e-4, rtol=1e-4), float(jnp.max(jnp.abs(out - ref)))
    print("KERNEL_OK")
</pallas_src>

<mosaic_0001>
module attributes {stable_mosaic.version = 11 : i64} {
  func.func @conv_layer_kernel(%arg0: i32, %arg1: memref<56x12xf32, #tpu.memory_space<vmem>>, %arg2: memref<12x8xf32, #tpu.memory_space<vmem>>, %arg3: memref<1x8xf32, #tpu.memory_space<vmem>>, %arg4: memref<24x16xf32, #tpu.memory_space<vmem>>, %arg5: memref<1x16xf32, #tpu.memory_space<vmem>>, %arg6: memref<48x32xf32, #tpu.memory_space<vmem>>, %arg7: memref<1x32xf32, #tpu.memory_space<vmem>>, %arg8: memref<56x32xf32, #tpu.memory_space<vmem>>) attributes {dimension_semantics = [#tpu.dimension_semantics<parallel>], iteration_bounds = array<i64: 1>, scalar_prefetch = 0 : i64, scratch_operands = 0 : i64, tpu.core_type = #tpu.core_type<tc>, window_params = [{transform_indices = @transform_0, window_bounds = array<i64: 56, 12>}, {pipeline_mode = #tpu.pipeline_mode<synchronous>, transform_indices = @transform_1, window_bounds = array<i64: 12, 8>}, {pipeline_mode = #tpu.pipeline_mode<synchronous>, transform_indices = @transform_2, window_bounds = array<i64: 1, 8>}, {pipeline_mode = #tpu.pipeline_mode<synchronous>, transform_indices = @transform_3, window_bounds = array<i64: 24, 16>}, {pipeline_mode = #tpu.pipeline_mode<synchronous>, transform_indices = @transform_4, window_bounds = array<i64: 1, 16>}, {pipeline_mode = #tpu.pipeline_mode<synchronous>, transform_indices = @transform_5, window_bounds = array<i64: 48, 32>}, {pipeline_mode = #tpu.pipeline_mode<synchronous>, transform_indices = @transform_6, window_bounds = array<i64: 1, 32>}, {transform_indices = @transform_7, window_bounds = array<i64: 56, 32>}]} {
    %0 = tpu.iota {dimensions = array<i32: 0>} : vector<56x1xi32>
    %c7_i32 = arith.constant 7 : i32
    %c0_i32 = arith.constant 0 : i32
    %1 = arith.cmpi eq, %c7_i32, %c0_i32 : i32
    %c1_i32 = arith.constant 1 : i32
    %2 = arith.select %1, %c1_i32, %c7_i32 : i32
    %3 = vector.broadcast %2 : i32 to vector<56x1xi32>
    %4 = arith.remsi %0, %3 : vector<56x1xi32>
    %c0_i32_0 = arith.constant 0 : i32
    %5 = vector.broadcast %c0_i32_0 : i32 to vector<56x1xi32>
    %6 = arith.cmpi ne, %4, %5 : vector<56x1xi32>
    %c0_i32_1 = arith.constant 0 : i32
    %7 = vector.broadcast %c0_i32_1 : i32 to vector<56x1xi32>
    %8 = arith.cmpi slt, %4, %7 : vector<56x1xi32>
    %c0_i32_2 = arith.constant 0 : i32
    %9 = arith.cmpi slt, %2, %c0_i32_2 : i32
    %10 = vector.broadcast %9 : i1 to vector<56x1xi1>
    %11 = vector.broadcast %10 : vector<56x1xi1> to vector<56x1xi1>
    %12 = arith.xori %8, %11 : vector<56x1xi1>
    %13 = arith.andi %12, %6 : vector<56x1xi1>
    %14 = vector.broadcast %2 : i32 to vector<56x1xi32>
    %15 = arith.addi %4, %14 : vector<56x1xi32>
    %16 = arith.select %13, %15, %4 : vector<56x1xi1>, vector<56x1xi32>
    %c0_i32_3 = arith.constant 0 : i32
    %17 = vector.broadcast %c0_i32_3 : i32 to vector<56x1xi32>
    %18 = arith.cmpi eq, %16, %17 : vector<56x1xi32>
    %c6_i32 = arith.constant 6 : i32
    %19 = vector.broadcast %c6_i32 : i32 to vector<56x1xi32>
    %20 = arith.cmpi eq, %16, %19 : vector<56x1xi32>
    %c0 = arith.constant 0 : index
    %c0_4 = arith.constant 0 : index
    %21 = vector.load %arg1[%c0, %c0_4] : memref<56x12xf32, #tpu.memory_space<vmem>>, vector<56x12xf32>
    %c0_5 = arith.constant 0 : index
    %c0_6 = arith.constant 0 : index
    %22 = vector.load %arg2[%c0_5, %c0_6] : memref<12x8xf32, #tpu.memory_space<vmem>>, vector<12x8xf32>
    %cst = arith.constant dense<0.000000e+00> : vector<56x8xf32>
    %23 = tpu.matmul %21, %22, %cst {dimension_numbers = #tpu.dot_dimension_numbers<[1], [0], [0], [1], [0, 0, 1, 1], [], []>} : vector<56x12xf32>, vector<12x8xf32>, vector<56x8xf32> -> vector<56x8xf32>
    %c0_7 = arith.constant 0 : index
    %c0_8 = arith.constant 0 : index
    %24 = vector.load %arg3[%c0_7, %c0_8] : memref<1x8xf32, #tpu.memory_space<vmem>>, vector<1x8xf32>
    %25 = vector.broadcast %24 : vector<1x8xf32> to vector<56x8xf32>
    %26 = arith.addf %23, %25 : vector<56x8xf32>
    %cst_9 = arith.constant 0.000000e+00 : f32
    %27 = vector.broadcast %cst_9 : f32 to vector<56x8xf32>
    %28 = arith.maximumf %26, %27 : vector<56x8xf32>
    %c1_i32_10 = arith.constant 1 : i32
    %29 = tpu.dynamic_rotate %28 by %c1_i32_10 dim 0 : vector<56x8xf32>, i32 -> vector<56x8xf32>
    %cst_11 = arith.constant 0.000000e+00 : f32
    %30 = vector.shape_cast %18 : vector<56x1xi1> to vector<56x1xi1>
    %31 = vector.broadcast %30 : vector<56x1xi1> to vector<56x8xi1>
    %32 = vector.broadcast %cst_11 : f32 to vector<56x8xf32>
    %33 = arith.select %31, %32, %29 : vector<56x8xi1>, vector<56x8xf32>
    %c55_i32 = arith.constant 55 : i32
    %34 = tpu.dynamic_rotate %28 by %c55_i32 dim 0 : vector<56x8xf32>, i32 -> vector<56x8xf32>
    %cst_12 = arith.constant 0.000000e+00 : f32
    %35 = vector.shape_cast %20 : vector<56x1xi1> to vector<56x1xi1>
    %36 = vector.broadcast %35 : vector<56x1xi1> to vector<56x8xi1>
    %37 = vector.broadcast %cst_12 : f32 to vector<56x8xf32>
    %38 = arith.select %36, %37, %34 : vector<56x8xi1>, vector<56x8xf32>
    %39 = tpu.concatenate %33, %28, %38 in 1 : vector<56x8xf32>, vector<56x8xf32>, vector<56x8xf32> -> vector<56x24xf32>
    %c0_13 = arith.constant 0 : index
    %c0_14 = arith.constant 0 : index
    %40 = vector.load %arg4[%c0_13, %c0_14] : memref<24x16xf32, #tpu.memory_space<vmem>>, vector<24x16xf32>
    %cst_15 = arith.constant dense<0.000000e+00> : vector<56x16xf32>
    %41 = tpu.matmul %39, %40, %cst_15 {dimension_numbers = #tpu.dot_dimension_numbers<[1], [0], [0], [1], [0, 0, 1, 1], [], []>} : vector<56x24xf32>, vector<24x16xf32>, vector<56x16xf32> -> vector<56x16xf32>
    %c0_16 = arith.constant 0 : index
    %c0_17 = arith.constant 0 : index
    %42 = vector.load %arg5[%c0_16, %c0_17] : memref<1x16xf32, #tpu.memory_space<vmem>>, vector<1x16xf32>
    %43 = vector.broadcast %42 : vector<1x16xf32> to vector<56x16xf32>
    %44 = arith.addf %41, %43 : vector<56x16xf32>
    %cst_18 = arith.constant 0.000000e+00 : f32
    %45 = vector.broadcast %cst_18 : f32 to vector<56x16xf32>
    %46 = arith.maximumf %44, %45 : vector<56x16xf32>
    %c1_i32_19 = arith.constant 1 : i32
    %47 = tpu.dynamic_rotate %46 by %c1_i32_19 dim 0 : vector<56x16xf32>, i32 -> vector<56x16xf32>
    %cst_20 = arith.constant 0.000000e+00 : f32
    %48 = vector.shape_cast %18 : vector<56x1xi1> to vector<56x1xi1>
    %49 = vector.broadcast %48 : vector<56x1xi1> to vector<56x16xi1>
    %50 = vector.broadcast %cst_20 : f32 to vector<56x16xf32>
    %51 = arith.select %49, %50, %47 : vector<56x16xi1>, vector<56x16xf32>
    %c55_i32_21 = arith.constant 55 : i32
    %52 = tpu.dynamic_rotate %46 by %c55_i32_21 dim 0 : vector<56x16xf32>, i32 -> vector<56x16xf32>
    %cst_22 = arith.constant 0.000000e+00 : f32
    %53 = vector.shape_cast %20 : vector<56x1xi1> to vector<56x1xi1>
    %54 = vector.broadcast %53 : vector<56x1xi1> to vector<56x16xi1>
    %55 = vector.broadcast %cst_22 : f32 to vector<56x16xf32>
    %56 = arith.select %54, %55, %52 : vector<56x16xi1>, vector<56x16xf32>
    %57 = tpu.concatenate %51, %46, %56 in 1 : vector<56x16xf32>, vector<56x16xf32>, vector<56x16xf32> -> vector<56x48xf32>
    %c0_23 = arith.constant 0 : index
    %c0_24 = arith.constant 0 : index
    %58 = vector.load %arg6[%c0_23, %c0_24] : memref<48x32xf32, #tpu.memory_space<vmem>>, vector<48x32xf32>
    %cst_25 = arith.constant dense<0.000000e+00> : vector<56x32xf32>
    %59 = tpu.matmul %57, %58, %cst_25 {dimension_numbers = #tpu.dot_dimension_numbers<[1], [0], [0], [1], [0, 0, 1, 1], [], []>} : vector<56x48xf32>, vector<48x32xf32>, vector<56x32xf32> -> vector<56x32xf32>
    %c0_26 = arith.constant 0 : index
    %c0_27 = arith.constant 0 : index
    %60 = vector.load %arg7[%c0_26, %c0_27] : memref<1x32xf32, #tpu.memory_space<vmem>>, vector<1x32xf32>
    %61 = vector.broadcast %60 : vector<1x32xf32> to vector<56x32xf32>
    %62 = arith.addf %59, %61 : vector<56x32xf32>
    %cst_28 = arith.constant 0.000000e+00 : f32
    %63 = vector.broadcast %cst_28 : f32 to vector<56x32xf32>
    %64 = arith.maximumf %62, %63 : vector<56x32xf32>
    %c0_29 = arith.constant 0 : index
    %c0_30 = arith.constant 0 : index
    %65 = vector.load %arg8[%c0_29, %c0_30] : memref<56x32xf32, #tpu.memory_space<vmem>>, vector<56x32xf32>
    tpu.vector_store %arg8[%c0_29, %c0_30], %64 {strides = array<i32>} : memref<56x32xf32, #tpu.memory_space<vmem>>, vector<56x32xf32>,
    return
  }
  func.func @transform_0(%arg0: i32) -> (i32, i32) {
    %c0_i32 = arith.constant 0 : i32
    %c0_i32_0 = arith.constant 0 : i32
    return %arg0, %c0_i32 : i32, i32
  }
  func.func @transform_1(%arg0: i32) -> (i32, i32) {
    %c0_i32 = arith.constant 0 : i32
    %c0_i32_0 = arith.constant 0 : i32
    %c0_i32_1 = arith.constant 0 : i32
    return %c0_i32, %c0_i32_0 : i32, i32
  }
  func.func @transform_2(%arg0: i32) -> (i32, i32) {
    %c0_i32 = arith.constant 0 : i32
    %c0_i32_0 = arith.constant 0 : i32
    %c0_i32_1 = arith.constant 0 : i32
    return %c0_i32, %c0_i32_0 : i32, i32
  }
  func.func @transform_3(%arg0: i32) -> (i32, i32) {
    %c0_i32 = arith.constant 0 : i32
    %c0_i32_0 = arith.constant 0 : i32
    %c0_i32_1 = arith.constant 0 : i32
    return %c0_i32, %c0_i32_0 : i32, i32
  }
  func.func @transform_4(%arg0: i32) -> (i32, i32) {
    %c0_i32 = arith.constant 0 : i32
    %c0_i32_0 = arith.constant 0 : i32
    %c0_i32_1 = arith.constant 0 : i32
    return %c0_i32, %c0_i32_0 : i32, i32
  }
  func.func @transform_5(%arg0: i32) -> (i32, i32) {
    %c0_i32 = arith.constant 0 : i32
    %c0_i32_0 = arith.constant 0 : i32
    %c0_i32_1 = arith.constant 0 : i32
    return %c0_i32, %c0_i32_0 : i32, i32
  }
  func.func @transform_6(%arg0: i32) -> (i32, i32) {
    %c0_i32 = arith.constant 0 : i32
    %c0_i32_0 = arith.constant 0 : i32
    %c0_i32_1 = arith.constant 0 : i32
    return %c0_i32, %c0_i32_0 : i32, i32
  }
  func.func @transform_7(%arg0: i32) -> (i32, i32) {
    %c0_i32 = arith.constant 0 : i32
    %c0_i32_0 = arith.constant 0 : i32
    return %arg0, %c0_i32 : i32, i32
  }
}

</mosaic_0001>

<llo_original>
// kernel: conv_layer_forward.1
$region0: #{conv_layer_forward.1}
  #allocation0 [shape = 'u32[]', space=smem, size = 0x4, offset = 0x4, fixed_abs, tag = 'smem constant byte address 0x4 - core index']
  #allocation1 [shape = 'u32[72,128]{1,0:T(1,128)}', space=vmem, size = 0x9000, scoped, tag = 'internal scratch']
  %s0 = inlined_call_operand.vmem [shape: f32[56,12], index: 0, kind: input, shape index: {}]
  %s1 = inlined_call_operand.vmem [shape: f32[12,8], index: 1, kind: input, shape index: {}]
  %s2 = inlined_call_operand.vmem [shape: f32[1,8], index: 2, kind: input, shape index: {}]
  %s3 = inlined_call_operand.vmem [shape: f32[24,16], index: 3, kind: input, shape index: {}]
  %s4 = inlined_call_operand.vmem [shape: f32[1,16], index: 4, kind: input, shape index: {}]
  %s5 = inlined_call_operand.vmem [shape: f32[48,32], index: 5, kind: input, shape index: {}]
  %s6 = inlined_call_operand.vmem [shape: f32[1,32], index: 6, kind: input, shape index: {}]
  %s7 = inlined_call_operand.vmem [shape: f32[56,32], index: 7, kind: output, shape index: {}]
  %s8 = sld [smem:[#allocation0]]
  $region38: #{conv_layer_forward.1} parent=0
    _
  %s10 = ssub.s32 1, %s8
  %s11 = scalar_select 0, %s10, %s8
  // Predicated region
  $region2: #{conv_layer_forward.1} parent=0 // pred_check
    _
  $region3: #{conv_layer_forward.1} parent=0 // pred_check_branch
    %13 = sbr.rel (0) target = $region5
  $region4: #{conv_layer_forward.1} parent=0 // pred_region
    _
  $region5: #{conv_layer_forward.1} parent=0 // pred_fallthru
    _
  // Predicated region
  $region6: #{conv_layer_forward.1} parent=0 // pred_check
    _
  $region7: #{conv_layer_forward.1} parent=0 // pred_check_branch
    %15 = sbr.rel (0) target = $region9
  $region8: #{conv_layer_forward.1} parent=0 // pred_region
    _
  $region9: #{conv_layer_forward.1} parent=0 // pred_fallthru
    _
  // Predicated region
  $region10: #{conv_layer_forward.1} parent=0 // pred_check
    _
  $region11: #{conv_layer_forward.1} parent=0 // pred_check_branch
    %17 = sbr.rel (0) target = $region13
  $region12: #{conv_layer_forward.1} parent=0 // pred_region
    _
  $region13: #{conv_layer_forward.1} parent=0 // pred_fallthru
    _
  // Predicated region
  $region14: #{conv_layer_forward.1} parent=0 // pred_check
    _
  $region15: #{conv_layer_forward.1} parent=0 // pred_check_branch
    %19 = sbr.rel (0) target = $region17
  $region16: #{conv_layer_forward.1} parent=0 // pred_region
    _
  $region17: #{conv_layer_forward.1} parent=0 // pred_fallthru
    _
  // Predicated region
  $region18: #{conv_layer_forward.1} parent=0 // pred_check
    _
  $region19: #{conv_layer_forward.1} parent=0 // pred_check_branch
    %21 = sbr.rel (0) target = $region21
  $region20: #{conv_layer_forward.1} parent=0 // pred_region
    _
  $region21: #{conv_layer_forward.1} parent=0 // pred_fallthru
    _
  // Predicated region
  $region22: #{conv_layer_forward.1} parent=0 // pred_check
    _
  $region23: #{conv_layer_forward.1} parent=0 // pred_check_branch
    %23 = sbr.rel (0) target = $region25
  $region24: #{conv_layer_forward.1} parent=0 // pred_region
    _
  $region25: #{conv_layer_forward.1} parent=0 // pred_fallthru
    _
  // Predicated region
  $region26: #{conv_layer_forward.1} parent=0 // pred_check
    _
  $region27: #{conv_layer_forward.1} parent=0 // pred_check_branch
    %25 = sbr.rel (0) target = $region29
  $region28: #{conv_layer_forward.1} parent=0 // pred_region
    _
  $region29: #{conv_layer_forward.1} parent=0 // pred_fallthru
    _
  %v26 = vlaneseq
  %v27 = vshrl.u32 %v26, 7
  %v28 = vadd.s32 %v27, 8
  %v29 = vadd.s32 %v27, 16
  %v30 = vadd.s32 %v27, 24
  %v31 = vadd.s32 %v27, 32
  %v32 = vadd.s32 %v27, 40
  %v33 = vadd.s32 %v27, 48
  %vm34 = vcmp.lt.s32.totalorder %v27, 0
  %v35 = vsub.s32 0, %v27
  %v36 = vsel %vm34, %v35, %v27
  %v37 = vand.u32 %v36, 65535
  %v38 = vshrl.u32 %v36, 16
  %v40 = vmul.u32 %v37, 9362
  %v41 = vmul.u32 %v37, 37449
  %v42 = vmul.u32 %v38, 9362
  %v43 = vmul.u32 %v38, 37449
  %v44 = vshll.u32 %v41, 16
  %v45 = vshrl.u32 %v41, 16
  %v46 = vshll.u32 %v42, 16
  %v47 = vshrl.u32 %v42, 16
  %vm48 = vc.u32 %v40, %v44
  %v49 = vsel %vm48, 1, 0
  %v50 = vadd.s32 %v40, %v44
  %v51 = vadd.s32 %v43, %v49
  %vm52 = vc.u32 %v50, %v46
  %v53 = vsel %vm52, 1, 0
  %v54 = vadd.s32 %v50, %v46
  %v55 = vadd.s32 %v51, %v53
  %v56 = vadd.s32 %v55, %v45
  %v57 = vadd.s32 %v56, %v47
  %vm58 = vc.u32 %v54, 2454267026
  %v59 = vsel %vm58, 1, 0
  %v60 = vadd.s32 %v57, %v59
  %v61 = vshrl.u32 %v60, 2
  %v62 = vmul.u32 %v61, 7
  %v63 = vsub.s32 %v36, %v62
  %v64 = vsub.s32 0, %v63
  %v65 = vsel %vm34, %v64, %v63
  %vm66 = vcmp.lt.s32.totalorder %v28, 0
  %v67 = vsub.s32 0, %v28
  %v68 = vsel %vm66, %v67, %v28
  %v69 = vand.u32 %v68, 65535
  %v70 = vshrl.u32 %v68, 16
  %v72 = vmul.u32 %v69, 9362
  %v73 = vmul.u32 %v69, 37449
  %v74 = vmul.u32 %v70, 9362
  %v75 = vmul.u32 %v70, 37449
  %v76 = vshll.u32 %v73, 16
  %v77 = vshrl.u32 %v73, 16
  %v78 = vshll.u32 %v74, 16
  %v79 = vshrl.u32 %v74, 16
  %vm80 = vc.u32 %v72, %v76
  %v81 = vsel %vm80, 1, 0
  %v82 = vadd.s32 %v72, %v76
  %v83 = vadd.s32 %v75, %v81
  %vm84 = vc.u32 %v82, %v78
  %v85 = vsel %vm84, 1, 0
  %v86 = vadd.s32 %v82, %v78
  %v87 = vadd.s32 %v83, %v85
  %v88 = vadd.s32 %v87, %v77
  %v89 = vadd.s32 %v88, %v79
  %vm90 = vc.u32 %v86, 2454267026
  %v91 = vsel %vm90, 1, 0
  %v92 = vadd.s32 %v89, %v91
  %v93 = vshrl.u32 %v92, 2
  %v94 = vmul.u32 %v93, 7
  %v95 = vsub.s32 %v68, %v94
  %v96 = vsub.s32 0, %v95
  %v97 = vsel %vm66, %v96, %v95
  %vm98 = vcmp.lt.s32.totalorder %v29, 0
  %v99 = vsub.s32 0, %v29
  %v100 = vsel %vm98, %v99, %v29
  %v101 = vand.u32 %v100, 65535
  %v102 = vshrl.u32 %v100, 16
  %v104 = vmul.u32 %v101, 9362
  %v105 = vmul.u32 %v101, 37449
  %v106 = vmul.u32 %v102, 9362
  %v107 = vmul.u32 %v102, 37449
  %v108 = vshll.u32 %v105, 16
  %v109 = vshrl.u32 %v105, 16
  %v110 = vshll.u32 %v106, 16
  %v111 = vshrl.u32 %v106, 16
  %vm112 = vc.u32 %v104, %v108
  %v113 = vsel %vm112, 1, 0
  %v114 = vadd.s32 %v104, %v108
  %v115 = vadd.s32 %v107, %v113
  %vm116 = vc.u32 %v114, %v110
  %v117 = vsel %vm116, 1, 0
  %v118 = vadd.s32 %v114, %v110
  %v119 = vadd.s32 %v115, %v117
  %v120 = vadd.s32 %v119, %v109
  %v121 = vadd.s32 %v120, %v111
  %vm122 = vc.u32 %v118, 2454267026
  %v123 = vsel %vm122, 1, 0
  %v124 = vadd.s32 %v121, %v123
  %v125 = vshrl.u32 %v124, 2
  %v126 = vmul.u32 %v125, 7
  %v127 = vsub.s32 %v100, %v126
  %v128 = vsub.s32 0, %v127
  %v129 = vsel %vm98, %v128, %v127
  %vm130 = vcmp.lt.s32.totalorder %v30, 0
  %v131 = vsub.s32 0, %v30
  %v132 = vsel %vm130, %v131, %v30
  %v133 = vand.u32 %v132, 65535
  %v134 = vshrl.u32 %v132, 16
  %v136 = vmul.u32 %v133, 9362
  %v137 = vmul.u32 %v133, 37449
  %v138 = vmul.u32 %v134, 9362
  %v139 = vmul.u32 %v134, 37449
  %v140 = vshll.u32 %v137, 16
  %v141 = vshrl.u32 %v137, 16
  %v142 = vshll.u32 %v138, 16
  %v143 = vshrl.u32 %v138, 16
  %vm144 = vc.u32 %v136, %v140
  %v145 = vsel %vm144, 1, 0
  %v146 = vadd.s32 %v136, %v140
  %v147 = vadd.s32 %v139, %v145
  %vm148 = vc.u32 %v146, %v142
  %v149 = vsel %vm148, 1, 0
  %v150 = vadd.s32 %v146, %v142
  %v151 = vadd.s32 %v147, %v149
  %v152 = vadd.s32 %v151, %v141
  %v153 = vadd.s32 %v152, %v143
  %vm154 = vc.u32 %v150, 2454267026
  %v155 = vsel %vm154, 1, 0
  %v156 = vadd.s32 %v153, %v155
  %v157 = vshrl.u32 %v156, 2
  %v158 = vmul.u32 %v157, 7
  %v159 = vsub.s32 %v132, %v158
  %v160 = vsub.s32 0, %v159
  %v161 = vsel %vm130, %v160, %v159
  %vm162 = vcmp.lt.s32.totalorder %v31, 0
  %v163 = vsub.s32 0, %v31
  %v164 = vsel %vm162, %v163, %v31
  %v165 = vand.u32 %v164, 65535
  %v166 = vshrl.u32 %v164, 16
  %v168 = vmul.u32 %v165, 9362
  %v169 = vmul.u32 %v165, 37449
  %v170 = vmul.u32 %v166, 9362
  %v171 = vmul.u32 %v166, 37449
  %v172 = vshll.u32 %v169, 16
  %v173 = vshrl.u32 %v169, 16
  %v174 = vshll.u32 %v170, 16
  %v175 = vshrl.u32 %v170, 16
  %vm176 = vc.u32 %v168, %v172
  %v177 = vsel %vm176, 1, 0
  %v178 = vadd.s32 %v168, %v172
  %v179 = vadd.s32 %v171, %v177
  %vm180 = vc.u32 %v178, %v174
  %v181 = vsel %vm180, 1, 0
  %v182 = vadd.s32 %v178, %v174
  %v183 = vadd.s32 %v179, %v181
  %v184 = vadd.s32 %v183, %v173
  %v185 = vadd.s32 %v184, %v175
  %vm186 = vc.u32 %v182, 2454267026
  %v187 = vsel %vm186, 1, 0
  %v188 = vadd.s32 %v185, %v187
  %v189 = vshrl.u32 %v188, 2
  %v190 = vmul.u32 %v189, 7
  %v191 = vsub.s32 %v164, %v190
  %v192 = vsub.s32 0, %v191
  %v193 = vsel %vm162, %v192, %v191
  %vm194 = vcmp.lt.s32.totalorder %v32, 0
  %v195 = vsub.s32 0, %v32
  %v196 = vsel %vm194, %v195, %v32
  %v197 = vand.u32 %v196, 65535
  %v198 = vshrl.u32 %v196, 16
  %v200 = vmul.u32 %v197, 9362
  %v201 = vmul.u32 %v197, 37449
  %v202 = vmul.u32 %v198, 9362
  %v203 = vmul.u32 %v198, 37449
  %v204 = vshll.u32 %v201, 16
  %v205 = vshrl.u32 %v201, 16
  %v206 = vshll.u32 %v202, 16
  %v207 = vshrl.u32 %v202, 16
  %vm208 = vc.u32 %v200, %v204
  %v209 = vsel %vm208, 1, 0
  %v210 = vadd.s32 %v200, %v204
  %v211 = vadd.s32 %v203, %v209
  %vm212 = vc.u32 %v210, %v206
  %v213 = vsel %vm212, 1, 0
  %v214 = vadd.s32 %v210, %v206
  %v215 = vadd.s32 %v211, %v213
  %v216 = vadd.s32 %v215, %v205
  %v217 = vadd.s32 %v216, %v207
  %vm218 = vc.u32 %v214, 2454267026
  %v219 = vsel %vm218, 1, 0
  %v220 = vadd.s32 %v217, %v219
  %v221 = vshrl.u32 %v220, 2
  %v222 = vmul.u32 %v221, 7
  %v223 = vsub.s32 %v196, %v222
  %v224 = vsub.s32 0, %v223
  %v225 = vsel %vm194, %v224, %v223
  %vm226 = vcmp.lt.s32.totalorder %v33, 0
  %v227 = vsub.s32 0, %v33
  %v228 = vsel %vm226, %v227, %v33
  %v229 = vand.u32 %v228, 65535
  %v230 = vshrl.u32 %v228, 16
  %v232 = vmul.u32 %v229, 9362
  %v233 = vmul.u32 %v229, 37449
  %v234 = vmul.u32 %v230, 9362
  %v235 = vmul.u32 %v230, 37449
  %v236 = vshll.u32 %v233, 16
  %v237 = vshrl.u32 %v233, 16
  %v238 = vshll.u32 %v234, 16
  %v239 = vshrl.u32 %v234, 16
  %vm240 = vc.u32 %v232, %v236
  %v241 = vsel %vm240, 1, 0
  %v242 = vadd.s32 %v232, %v236
  %v243 = vadd.s32 %v235, %v241
  %vm244 = vc.u32 %v242, %v238
  %v245 = vsel %vm244, 1, 0
  %v246 = vadd.s32 %v242, %v238
  %v247 = vadd.s32 %v243, %v245
  %v248 = vadd.s32 %v247, %v237
  %v249 = vadd.s32 %v248, %v239
  %vm250 = vc.u32 %v246, 2454267026
  %v251 = vsel %vm250, 1, 0
  %v252 = vadd.s32 %v249, %v251
  %v253 = vshrl.u32 %v252, 2
  %v254 = vmul.u32 %v253, 7
  %v255 = vsub.s32 %v228, %v254
  %v256 = vsub.s32 0, %v255
  %v257 = vsel %vm226, %v256, %v255
  %vm258 = vcmp.ne.s32.totalorder %v65, 0
  %vm259 = vcmp.ne.s32.totalorder %v97, 0
  %vm260 = vcmp.ne.s32.totalorder %v129, 0
  %vm261 = vcmp.ne.s32.totalorder %v161, 0
  %vm262 = vcmp.ne.s32.totalorder %v193, 0
  %vm263 = vcmp.ne.s32.totalorder %v225, 0
  %vm264 = vcmp.ne.s32.totalorder %v257, 0
  %vm265 = vcmp.lt.s32.totalorder %v65, 0
  %vm266 = vcmp.lt.s32.totalorder %v97, 0
  %vm267 = vcmp.lt.s32.totalorder %v129, 0
  %vm268 = vcmp.lt.s32.totalorder %v161, 0
  %vm269 = vcmp.lt.s32.totalorder %v193, 0
  %vm270 = vcmp.lt.s32.totalorder %v225, 0
  %vm271 = vcmp.lt.s32.totalorder %v257, 0
  %vm272 = vmand %vm265, %vm258
  %vm273 = vmand %vm266, %vm259
  %vm274 = vmand %vm267, %vm260
  %vm275 = vmand %vm268, %vm261
  %vm276 = vmand %vm269, %vm262
  %vm277 = vmand %vm270, %vm263
  %vm278 = vmand %vm271, %vm264
  %v279 = vadd.s32 %v65, 7
  %v280 = vadd.s32 %v97, 7
  %v281 = vadd.s32 %v129, 7
  %v282 = vadd.s32 %v161, 7
  %v283 = vadd.s32 %v193, 7
  %v284 = vadd.s32 %v225, 7
  %v285 = vadd.s32 %v257, 7
  %v286 = vsel %vm272, %v279, %v65
  %v287 = vsel %vm273, %v280, %v97
  %v288 = vsel %vm274, %v281, %v129
  %v289 = vsel %vm275, %v282, %v161
  %v290 = vsel %vm276, %v283, %v193
  %v291 = vsel %vm277, %v284, %v225
  %v292 = vsel %vm278, %v285, %v257
  %vm293 = vcmp.eq.s32.totalorder %v286, 0
  %vm294 = vcmp.eq.s32.totalorder %v287, 0
  %vm295 = vcmp.eq.s32.totalorder %v288, 0
  %vm296 = vcmp.eq.s32.totalorder %v289, 0
  %vm297 = vcmp.eq.s32.totalorder %v290, 0
  %vm298 = vcmp.eq.s32.totalorder %v291, 0
  %vm299 = vcmp.eq.s32.totalorder %v292, 0
  %vm300 = vcmp.eq.s32.totalorder %v286, 6
  %vm301 = vcmp.eq.s32.totalorder %v287, 6
  %vm302 = vcmp.eq.s32.totalorder %v288, 6
  %vm303 = vcmp.eq.s32.totalorder %v289, 6
  %vm304 = vcmp.eq.s32.totalorder %v290, 6
  %vm305 = vcmp.eq.s32.totalorder %v291, 6
  %vm306 = vcmp.eq.s32.totalorder %v292, 6
  %v307 = vld [vmem:[%s0] sm:$0xff]
  %v308 = vld [vmem:[%s0 + $0x8] sm:$0xff]
  %v309 = vld [vmem:[%s0 + $0x10] sm:$0xff]
  %v310 = vld [vmem:[%s0 + $0x18] sm:$0xff]
  %v311 = vld [vmem:[%s0 + $0x20] sm:$0xff]
  %v312 = vld [vmem:[%s0 + $0x28] sm:$0xff]
  %v313 = vld [vmem:[%s0 + $0x30] sm:$0xff]
  %v314 = vld [vmem:[%s1] sm:$0xff]
  %v315 = vld [vmem:[%s1 + $0x8] sm:$0xf]
  %v316 = vld [vmem:[%s2] sm:$0x1]
  %v318 = vperm.slane %v316, 0
  %vm320 = vcmask 97280
  %v322 = vsel %vm320, %v307, 0
  %v325 = vsel %vm320, %v308, 0
  %v328 = vsel %vm320, %v309, 0
  %v331 = vsel %vm320, %v310, 0
  %v334 = vsel %vm320, %v311, 0
  %v337 = vsel %vm320, %v312, 0
  %v340 = vsel %vm320, %v313, 0
  %vm342 = vcmask 1043456
  %v344 = vsel %vm342, %v315, 0
  %346 = vmatpush.msra.mxu0 0.0
  %347 = vmatpush.msra.mxu0 0.0
  %348 = vmatpush.msra.mxu0 0.0
  %349 = vmatpush.msra.mxu0 0.0
  %350 = vmatpush.msra.mxu0 0.0
  %351 = vmatpush.msra.mxu0 0.0
  %352 = vmatpush.msra.mxu0 0.0
  %353 = vmatpush.msra.mxu0 0.0
  %354 = vmatpush.msra.mxu0 0.0
  %355 = vmatpush.msra.mxu0 0.0
  %356 = vmatpush.msra.mxu0 0.0
  %357 = vmatpush.msra.mxu0 0.0
  %358 = vmatpush.msra.mxu0 0.0
  %359 = vmatpush.msra.mxu0 0.0
  %360 = vmatpush.msra.mxu0 %v344
  %361 = vmatpush.msra.mxu0 %v314
  %362 = vmatmul.f32.gmra.mxu0 %v322
  %v363 = vpop.f32.mrf.mxu0
  %v364 = vadd.f32 %v318, %v363
  %365 = vmatmul.f32.gmra.mxu0 %v325
  %v366 = vpop.f32.mrf.mxu0
  %v367 = vadd.f32 %v318, %v366
  %368 = vmatmul.f32.gmra.mxu0 %v328
  %v369 = vpop.f32.mrf.mxu0
  %v370 = vadd.f32 %v318, %v369
  %371 = vmatmul.f32.gmra.mxu0 %v331
  %v372 = vpop.f32.mrf.mxu0
  %v373 = vadd.f32 %v318, %v372
  %374 = vmatmul.f32.gmra.mxu0 %v334
  %v375 = vpop.f32.mrf.mxu0
  %v376 = vadd.f32 %v318, %v375
  %377 = vmatmul.f32.gmra.mxu0 %v337
  %v378 = vpop.f32.mrf.mxu0
  %v379 = vadd.f32 %v318, %v378
  %380 = vmatmul.f32.gmra.mxu0 %v340
  %v381 = vpop.f32.mrf.mxu0
  %v382 = vadd.f32 %v318, %v381
  %383 = vdwg.mxu0
  %v384 = vmax.f32 %v364, 0.0
  %v385 = vmax.f32 %v367, 0.0
  %v386 = vmax.f32 %v370, 0.0
  %v387 = vmax.f32 %v373, 0.0
  %v388 = vmax.f32 %v376, 0.0
  %v389 = vmax.f32 %v379, 0.0
  %v390 = vmax.f32 %v382, 0.0
  %v391 = vrot.slane %v384, 7
  %v392 = vrot.slane %v385, 7
  %v393 = vrot.slane %v386, 7
  %v394 = vrot.slane %v387, 7
  %v395 = vrot.slane %v388, 7
  %v396 = vrot.slane %v389, 7
  %v397 = vrot.slane %v390, 7
  %vm398 = vcmp.lt.s32.totalorder %v27, 1
  %v399 = vsel %vm398, %v396, %v397
  %v400 = vsel %vm398, %v395, %v396
  %v401 = vsel %vm398, %v394, %v395
  %v402 = vsel %vm398, %v393, %v394
  %v403 = vsel %vm398, %v392, %v393
  %v404 = vsel %vm398, %v391, %v392
  %v405 = vsel %vm398, %v397, %v391
  %v406 = vsel %vm293, 1, 0
  %v407 = vsel %vm294, 1, 0
  %v408 = vsel %vm295, 1, 0
  %v409 = vsel %vm296, 1, 0
  %v410 = vsel %vm297, 1, 0
  %v411 = vsel %vm298, 1, 0
  %v412 = vsel %vm299, 1, 0
  %vm413 = vcmp.eq.s32.totalorder %v406, 1
  %vm414 = vcmp.eq.s32.totalorder %v407, 1
  %vm415 = vcmp.eq.s32.totalorder %v408, 1
  %vm416 = vcmp.eq.s32.totalorder %v409, 1
  %vm417 = vcmp.eq.s32.totalorder %v410, 1
  %vm418 = vcmp.eq.s32.totalorder %v411, 1
  %vm419 = vcmp.eq.s32.totalorder %v412, 1
  %v420 = vsel %vm413, 0.0, %v405
  %v421 = vsel %vm414, 0.0, %v404
  %v422 = vsel %vm415, 0.0, %v403
  %v423 = vsel %vm416, 0.0, %v402
  %v424 = vsel %vm417, 0.0, %v401
  %v425 = vsel %vm418, 0.0, %v400
  %v426 = vsel %vm419, 0.0, %v399
  %v427 = vrot.slane %v384, 1
  %v428 = vrot.slane %v385, 1
  %v429 = vrot.slane %v386, 1
  %v430 = vrot.slane %v387, 1
  %v431 = vrot.slane %v388, 1
  %v432 = vrot.slane %v389, 1
  %v433 = vrot.slane %v390, 1
  %vm434 = vcmp.lt.s32.totalorder %v27, 7
  %v435 = vsel %vm434, %v432, %v433
  %v436 = vsel %vm434, %v431, %v432
  %v437 = vsel %vm434, %v430, %v431
  %v438 = vsel %vm434, %v429, %v430
  %v439 = vsel %vm434, %v428, %v429
  %v440 = vsel %vm434, %v427, %v428
  %v441 = vsel %vm434, %v433, %v427
  %v442 = vsel %vm300, 1, 0
  %v443 = vsel %vm301, 1, 0
  %v444 = vsel %vm302, 1, 0
  %v445 = vsel %vm303, 1, 0
  %v446 = vsel %vm304, 1, 0
  %v447 = vsel %vm305, 1, 0
  %v448 = vsel %vm306, 1, 0
  %vm449 = vcmp.eq.s32.totalorder %v442, 1
  %vm450 = vcmp.eq.s32.totalorder %v443, 1
  %vm451 = vcmp.eq.s32.totalorder %v444, 1
  %vm452 = vcmp.eq.s32.totalorder %v445, 1
  %vm453 = vcmp.eq.s32.totalorder %v446, 1
  %vm454 = vcmp.eq.s32.totalorder %v447, 1
  %vm455 = vcmp.eq.s32.totalorder %v448, 1
  %v456 = vsel %vm449, 0.0, %v440
  %v457 = vsel %vm450, 0.0, %v439
  %v458 = vsel %vm451, 0.0, %v438
  %v459 = vsel %vm452, 0.0, %v437
  %v460 = vsel %vm453, 0.0, %v436
  %v461 = vsel %vm454, 0.0, %v435
  %v462 = vsel %vm455, 0.0, %v441
  %470 = vrot.lane.b32.xlu0 %v384, 8
  %v471 = vpop.permute.xlu0 %470
  %472 = vrot.lane.b32.xlu0 %v385, 8
  %v473 = vpop.permute.xlu0 %472
  %474 = vrot.lane.b32.xlu0 %v386, 8
  %v475 = vpop.permute.xlu0 %474
  %476 = vrot.lane.b32.xlu0 %v387, 8
  %v477 = vpop.permute.xlu0 %476
  %478 = vrot.lane.b32.xlu0 %v388, 8
  %v479 = vpop.permute.xlu0 %478
  %480 = vrot.lane.b32.xlu0 %v389, 8
  %v481 = vpop.permute.xlu0 %480
  %482 = vrot.lane.b32.xlu0 %v390, 8
  %v483 = vpop.permute.xlu0 %482
  %498 = vrot.lane.b32.xlu0 %v456, 16
  %v499 = vpop.permute.xlu0 %498
  %500 = vrot.lane.b32.xlu0 %v457, 16
  %v501 = vpop.permute.xlu0 %500
  %502 = vrot.lane.b32.xlu0 %v458, 16
  %v503 = vpop.permute.xlu0 %502
  %504 = vrot.lane.b32.xlu0 %v459, 16
  %v505 = vpop.permute.xlu0 %504
  %506 = vrot.lane.b32.xlu0 %v460, 16
  %v507 = vpop.permute.xlu0 %506
  %508 = vrot.lane.b32.xlu0 %v461, 16
  %v509 = vpop.permute.xlu0 %508
  %510 = vrot.lane.b32.xlu0 %v462, 16
  %v511 = vpop.permute.xlu0 %510
  %vm519 = vcmask 64512
  %v520 = vsel %vm519, %v420, %v471
  %v521 = vsel %vm519, %v421, %v473
  %v522 = vsel %vm519, %v422, %v475
  %v523 = vsel %vm519, %v423, %v477
  %v524 = vsel %vm519, %v424, %v479
  %v525 = vsel %vm519, %v425, %v481
  %v526 = vsel %vm519, %v426, %v483
  %vm527 = vcmask 130048
  %v528 = vsel %vm527, %v520, %v499
  %v529 = vsel %vm527, %v521, %v501
  %v530 = vsel %vm527, %v522, %v503
  %v531 = vsel %vm527, %v523, %v505
  %v532 = vsel %vm527, %v524, %v507
  %v533 = vsel %vm527, %v525, %v509
  %v534 = vsel %vm527, %v526, %v511
  %v535 = vld [vmem:[%s3] sm:$0xff]
  %v536 = vld [vmem:[%s3 + $0x8] sm:$0xff]
  %v537 = vld [vmem:[%s3 + $0x10] sm:$0xff]
  %v538 = vld [vmem:[%s4] sm:$0x1]
  %v540 = vperm.slane %v538, 0
  %vm542 = vcmask 195584
  %v544 = vsel %vm542, %v528, 0
  %v547 = vsel %vm542, %v529, 0
  %v550 = vsel %vm542, %v530, 0
  %v553 = vsel %vm542, %v531, 0
  %v556 = vsel %vm542, %v532, 0
  %v559 = vsel %vm542, %v533, 0
  %v562 = vsel %vm542, %v534, 0
  %564 = vmatpush.msra.mxu0 0.0
  %565 = vmatpush.msra.mxu0 0.0
  %566 = vmatpush.msra.mxu0 0.0
  %567 = vmatpush.msra.mxu0 0.0
  %568 = vmatpush.msra.mxu0 0.0
  %569 = vmatpush.msra.mxu0 0.0
  %570 = vmatpush.msra.mxu0 0.0
  %571 = vmatpush.msra.mxu0 0.0
  %572 = vmatpush.msra.mxu0 0.0
  %573 = vmatpush.msra.mxu0 0.0
  %574 = vmatpush.msra.mxu0 0.0
  %575 = vmatpush.msra.mxu0 0.0
  %576 = vmatpush.msra.mxu0 0.0
  %577 = vmatpush.msra.mxu0 %v537
  %578 = vmatpush.msra.mxu0 %v536
  %579 = vmatpush.msra.mxu0 %v535
  %580 = vmatmul.f32.gmra.mxu0 %v544
  %v581 = vpop.f32.mrf.mxu0
  %v582 = vadd.f32 %v540, %v581
  %583 = vmatmul.f32.gmra.mxu0 %v547
  %v584 = vpop.f32.mrf.mxu0
  %v585 = vadd.f32 %v540, %v584
  %586 = vmatmul.f32.gmra.mxu0 %v550
  %v587 = vpop.f32.mrf.mxu0
  %v588 = vadd.f32 %v540, %v587
  %589 = vmatmul.f32.gmra.mxu0 %v553
  %v590 = vpop.f32.mrf.mxu0
  %v591 = vadd.f32 %v540, %v590
  %592 = vmatmul.f32.gmra.mxu0 %v556
  %v593 = vpop.f32.mrf.mxu0
  %v594 = vadd.f32 %v540, %v593
  %595 = vmatmul.f32.gmra.mxu0 %v559
  %v596 = vpop.f32.mrf.mxu0
  %v597 = vadd.f32 %v540, %v596
  %598 = vmatmul.f32.gmra.mxu0 %v562
  %v599 = vpop.f32.mrf.mxu0
  %v600 = vadd.f32 %v540, %v599
  %601 = vdwg.mxu0
  %v602 = vmax.f32 %v582, 0.0
  %v603 = vmax.f32 %v585, 0.0
  %v604 = vmax.f32 %v588, 0.0
  %v605 = vmax.f32 %v591, 0.0
  %v606 = vmax.f32 %v594, 0.0
  %v607 = vmax.f32 %v597, 0.0
  %v608 = vmax.f32 %v600, 0.0
  %v609 = vrot.slane %v602, 7
  %v610 = vrot.slane %v603, 7
  %v611 = vrot.slane %v604, 7
  %v612 = vrot.slane %v605, 7
  %v613 = vrot.slane %v606, 7
  %v614 = vrot.slane %v607, 7
  %v615 = vrot.slane %v608, 7
  %v616 = vsel %vm398, %v614, %v615
  %v617 = vsel %vm398, %v613, %v614
  %v618 = vsel %vm398, %v612, %v613
  %v619 = vsel %vm398, %v611, %v612
  %v620 = vsel %vm398, %v610, %v611
  %v621 = vsel %vm398, %v609, %v610
  %v622 = vsel %vm398, %v615, %v609
  %v623 = vsel %vm413, 0.0, %v622
  %v624 = vsel %vm414, 0.0, %v621
  %v625 = vsel %vm415, 0.0, %v620
  %v626 = vsel %vm416, 0.0, %v619
  %v627 = vsel %vm417, 0.0, %v618
  %v628 = vsel %vm418, 0.0, %v617
  %v629 = vsel %vm419, 0.0, %v616
  %v630 = vrot.slane %v602, 1
  %v631 = vrot.slane %v603, 1
  %v632 = vrot.slane %v604, 1
  %v633 = vrot.slane %v605, 1
  %v634 = vrot.slane %v606, 1
  %v635 = vrot.slane %v607, 1
  %v636 = vrot.slane %v608, 1
  %v637 = vsel %vm434, %v635, %v636
  %v638 = vsel %vm434, %v634, %v635
  %v639 = vsel %vm434, %v633, %v634
  %v640 = vsel %vm434, %v632, %v633
  %v641 = vsel %vm434, %v631, %v632
  %v642 = vsel %vm434, %v630, %v631
  %v643 = vsel %vm434, %v636, %v630
  %v644 = vsel %vm449, 0.0, %v642
  %v645 = vsel %vm450, 0.0, %v641
  %v646 = vsel %vm451, 0.0, %v640
  %v647 = vsel %vm452, 0.0, %v639
  %v648 = vsel %vm453, 0.0, %v638
  %v649 = vsel %vm454, 0.0, %v637
  %v650 = vsel %vm455, 0.0, %v643
  %658 = vrot.lane.b32.xlu0 %v602, 16
  %v659 = vpop.permute.xlu0 %658
  %660 = vrot.lane.b32.xlu0 %v603, 16
  %v661 = vpop.permute.xlu0 %660
  %662 = vrot.lane.b32.xlu0 %v604, 16
  %v663 = vpop.permute.xlu0 %662
  %664 = vrot.lane.b32.xlu0 %v605, 16
  %v665 = vpop.permute.xlu0 %664
  %666 = vrot.lane.b32.xlu0 %v606, 16
  %v667 = vpop.permute.xlu0 %666
  %668 = vrot.lane.b32.xlu0 %v607, 16
  %v669 = vpop.permute.xlu0 %668
  %670 = vrot.lane.b32.xlu0 %v608, 16
  %v671 = vpop.permute.xlu0 %670
  %686 = vrot.lane.b32.xlu0 %v644, 32
  %v687 = vpop.permute.xlu0 %686
  %688 = vrot.lane.b32.xlu0 %v645, 32
  %v689 = vpop.permute.xlu0 %688
  %690 = vrot.lane.b32.xlu0 %v646, 32
  %v691 = vpop.permute.xlu0 %690
  %692 = vrot.lane.b32.xlu0 %v647, 32
  %v693 = vpop.permute.xlu0 %692
  %694 = vrot.lane.b32.xlu0 %v648, 32
  %v695 = vpop.permute.xlu0 %694
  %696 = vrot.lane.b32.xlu0 %v649, 32
  %v697 = vpop.permute.xlu0 %696
  %698 = vrot.lane.b32.xlu0 %v650, 32
  %v699 = vpop.permute.xlu0 %698
  %v707 = vsel %vm527, %v623, %v659
  %v708 = vsel %vm527, %v624, %v661
  %v709 = vsel %vm527, %v625, %v663
  %v710 = vsel %vm527, %v626, %v665
  %v711 = vsel %vm527, %v627, %v667
  %v712 = vsel %vm527, %v628, %v669
  %v713 = vsel %vm527, %v629, %v671
  %vm714 = vcmask 261120
  %v715 = vsel %vm714, %v707, %v687
  %v716 = vsel %vm714, %v708, %v689
  %v717 = vsel %vm714, %v709, %v691
  %v718 = vsel %vm714, %v710, %v693
  %v719 = vsel %vm714, %v711, %v695
  %v720 = vsel %vm714, %v712, %v697
  %v721 = vsel %vm714, %v713, %v699
  %v722 = vld [vmem:[%s5] sm:$0xff]
  %v723 = vld [vmem:[%s5 + $0x8] sm:$0xff]
  %v724 = vld [vmem:[%s5 + $0x10] sm:$0xff]
  %v725 = vld [vmem:[%s5 + $0x18] sm:$0xff]
  %v726 = vld [vmem:[%s5 + $0x20] sm:$0xff]
  %v727 = vld [vmem:[%s5 + $0x28] sm:$0xff]
  %v728 = vld [vmem:[%s6] sm:$0x1]
  %v730 = vperm.slane %v728, 0
  %vm732 = vcmask 392192
  %v734 = vsel %vm732, %v715, 0
  %v737 = vsel %vm732, %v716, 0
  %v740 = vsel %vm732, %v717, 0
  %v743 = vsel %vm732, %v718, 0
  %v746 = vsel %vm732, %v719, 0
  %v749 = vsel %vm732, %v720, 0
  %v752 = vsel %vm732, %v721, 0
  %754 = vmatpush.msra.mxu0 0.0
  %755 = vmatpush.msra.mxu0 0.0
  %756 = vmatpush.msra.mxu0 0.0
  %757 = vmatpush.msra.mxu0 0.0
  %758 = vmatpush.msra.mxu0 0.0
  %759 = vmatpush.msra.mxu0 0.0
  %760 = vmatpush.msra.mxu0 0.0
  %761 = vmatpush.msra.mxu0 0.0
  %762 = vmatpush.msra.mxu0 0.0
  %763 = vmatpush.msra.mxu0 0.0
  %764 = vmatpush.msra.mxu0 %v727
  %765 = vmatpush.msra.mxu0 %v726
  %766 = vmatpush.msra.mxu0 %v725
  %767 = vmatpush.msra.mxu0 %v724
  %768 = vmatpush.msra.mxu0 %v723
  %769 = vmatpush.msra.mxu0 %v722
  %770 = vmatmul.f32.gmra.mxu0 %v734
  %v771 = vpop.f32.mrf.mxu0
  %v772 = vadd.f32 %v730, %v771
  %773 = vmatmul.f32.gmra.mxu0 %v737
  %v774 = vpop.f32.mrf.mxu0
  %v775 = vadd.f32 %v730, %v774
  %776 = vmatmul.f32.gmra.mxu0 %v740
  %v777 = vpop.f32.mrf.mxu0
  %v778 = vadd.f32 %v730, %v777
  %779 = vmatmul.f32.gmra.mxu0 %v743
  %v780 = vpop.f32.mrf.mxu0
  %v781 = vadd.f32 %v730, %v780
  %782 = vmatmul.f32.gmra.mxu0 %v746
  %v783 = vpop.f32.mrf.mxu0
  %v784 = vadd.f32 %v730, %v783
  %785 = vmatmul.f32.gmra.mxu0 %v749
  %v786 = vpop.f32.mrf.mxu0
  %v787 = vadd.f32 %v730, %v786
  %788 = vmatmul.f32.gmra.mxu0 %v752
  %v789 = vpop.f32.mrf.mxu0
  %v790 = vadd.f32 %v730, %v789
  %791 = vdwg.mxu0
  %v792 = vmax.f32 %v772, 0.0
  %v793 = vmax.f32 %v775, 0.0
  %v794 = vmax.f32 %v778, 0.0
  %v795 = vmax.f32 %v781, 0.0
  %v796 = vmax.f32 %v784, 0.0
  %v797 = vmax.f32 %v787, 0.0
  %v798 = vmax.f32 %v790, 0.0
  %799 = vst.msk [vmem:[%s7] sm:$0xff] %vm714, %v792
  %800 = vst.msk [vmem:[%s7 + $0x8] sm:$0xff] %vm714, %v793
  %801 = vst.msk [vmem:[%s7 + $0x10] sm:$0xff] %vm714, %v794
  %802 = vst.msk [vmem:[%s7 + $0x18] sm:$0xff] %vm714, %v795
  %803 = vst.msk [vmem:[%s7 + $0x20] sm:$0xff] %vm714, %v796
  %804 = vst.msk [vmem:[%s7 + $0x28] sm:$0xff] %vm714, %v797
  %805 = vst.msk [vmem:[%s7 + $0x30] sm:$0xff] %vm714, %v798
  // Predicated region
  $region30: #{conv_layer_forward.1} parent=0 // pred_check
    _
  $region31: #{conv_layer_forward.1} parent=0 // pred_check_branch
    %807 = sbr.rel (0) target = $region33
  $region32: #{conv_layer_forward.1} parent=0 // pred_region
    _
  $region33: #{conv_layer_forward.1} parent=0 // pred_fallthru
    _
  // Predicated region
  $region34: #{conv_layer_forward.1} parent=0 // pred_check
    _
  $region35: #{conv_layer_forward.1} parent=0 // pred_check_branch
    %809 = sbr.rel (0) target = $region37
  $region36: #{conv_layer_forward.1} parent=0 // pred_region
    _
  $region37: #{conv_layer_forward.1} parent=0 // pred_fallthru
    _

</llo_original>
